<compile_context>
chip_gen: v7x
topology: tpu7x:2x2x1
jax: 0.10.0
libtpu: 0.0.40
codegen_flags: <defaults>
</compile_context>

<pallas_src>
import jax
import jax.numpy as jnp
from jax.experimental import pallas as pl
from jax.experimental.pallas import tpu as pltpu


def _round_up(a, m):
    return ((a + m - 1) // m) * m


def _mlp_kernel(x_ref, w1_ref, b1_ref, w2t_ref, b2t_ref, out_ref):
    # x_ref:   [TB, D_in]   input dtype (cast in-kernel to MXU dtype)
    # w1_ref:  [D_in, H]    compute dtype (resident in VMEM across the grid)
    # b1_ref:  [1, H]       f32
    # w2t_ref: [C_pad, H]   compute dtype, second layer stored transposed
    # b2t_ref: [C_pad, 1]   f32
    # out_ref: [C_pad, TB]  f32, transposed output (classes x batch)
    x = x_ref[...].astype(w1_ref.dtype)

    # Layer 1 on the MXU, f32 accumulation; bias + ReLU in f32 on the VPU.
    h = jnp.dot(x, w1_ref[...], preferred_element_type=jnp.float32)
    h = jnp.maximum(h + b1_ref[...], 0.0)

    # Layer 2, transposed: (C_pad, H) x (TB, H)^T -> (C_pad, TB).
    # Both operands contract on their last (H) axis -> MXU "NT" matmul, no
    # explicit XLU transpose of h.
    h = h.astype(w2t_ref.dtype)
    o_t = jax.lax.dot_general(
        w2t_ref[...], h, (((1,), (1,)), ((), ())),
        preferred_element_type=jnp.float32)
    out_ref[...] = (o_t + b2t_ref[...]).astype(out_ref.dtype)


def prepare_params(w1, b1, w2, b2, *, compute_dtype=jnp.bfloat16):
    """One-time conversion of parameters into kernel-ready layout.

    w1: [D_in, H], b1: [H], w2: [H, C], b2: [C]   (all [in, out] layout,
    i.e. the transpose of PyTorch's nn.Linear weight layout).
    """
    D_in, H = w1.shape
    C = w2.shape[1]
    C_pad = max(8, _round_up(C, 8))          # sublane-aligned class axis

    w1_c = w1.astype(compute_dtype)
    b1_r = jnp.asarray(b1).astype(jnp.float32).reshape(1, H)
    # Second layer stored transposed + zero-padded to C_pad rows.
    w2_t = jnp.zeros((C_pad, H), compute_dtype).at[:C, :].set(
        jnp.asarray(w2).astype(compute_dtype).T)
    b2_t = jnp.zeros((C_pad, 1), jnp.float32).at[:C, 0].set(
        jnp.asarray(b2).astype(jnp.float32))
    return {"w1": w1_c, "b1": b1_r, "w2t": w2_t, "b2t": b2_t,
            "num_classes": C}


def face_recognition_forward(x, params, *, tile_b=2048, use_pallas="auto"):
    """Forward pass. x: [B, D_in] (f32 or bf16; bf16 halves HBM read traffic)."""
    w1, b1 = params["w1"], params["b1"]
    w2t, b2t = params["w2t"], params["b2t"]
    C = params["num_classes"]

    B, D_in = x.shape
    assert D_in == w1.shape[0]
    H = w1.shape[1]
    C_pad = w2t.shape[0]

    # Batch tile: multiple of 128 so the transposed output's lane axis gives
    # an unmasked vst on interior blocks; tiny batches use tb == B.
    if B >= 128:
        tb = min(tile_b, _round_up(B, 128))
        tb = max(128, (tb // 128) * 128)
    else:
        tb = B
    grid_steps = pl.cdiv(B, tb)

    if use_pallas == "auto" and grid_steps <= 1:
        # Single-step grid => the pallas_call is pure dispatch overhead; let
        # XLA fuse the tiny MLP with surrounding ops instead.
        h = jnp.maximum(
            jnp.dot(x.astype(w1.dtype), w1,
                    preferred_element_type=jnp.float32) + b1, 0.0)
        o = jnp.dot(h.astype(w2t.dtype), w2t.T,
                    preferred_element_type=jnp.float32) + b2t.T
        return o[:, :C]

    flops = 2 * B * D_in * H + 2 * B * H * C_pad
    bytes_accessed = (x.size * x.dtype.itemsize
                      + w1.size * w1.dtype.itemsize
                      + w2t.size * w2t.dtype.itemsize
                      + b1.size * 4 + b2t.size * 4
                      + C_pad * B * 4)

    out_t = pl.pallas_call(
        _mlp_kernel,
        out_shape=jax.ShapeDtypeStruct((C_pad, B), jnp.float32),
        grid=(grid_steps,),
        in_specs=[
            # x: tiled over the batch grid axis -> double-buffered by Pallas.
            pl.BlockSpec((tb, D_in), lambda i: (i, 0)),
            # Weights / biases: same block every step -> resident in VMEM.
            pl.BlockSpec((D_in, H), lambda i: (0, 0)),
            pl.BlockSpec((1, H), lambda i: (0, 0)),
            pl.BlockSpec((C_pad, H), lambda i: (0, 0)),
            pl.BlockSpec((C_pad, 1), lambda i: (0, 0)),
        ],
        # Transposed output: lane axis = batch tile (128-multiple interior).
        out_specs=pl.BlockSpec((C_pad, tb), lambda i: (0, i)),
        compiler_params=pltpu.CompilerParams(
            # Batch axis is independent -> megacore sharding on v7x.
            dimension_semantics=("parallel",),
        ),
        cost_estimate=pl.CostEstimate(
            flops=flops, transcendentals=0, bytes_accessed=bytes_accessed),
    )(x, w1, b1, w2t, b2t)

    # Tiny (C, B) -> (B, C) transpose + slice in plain JAX.
    return out_t[:C, :].T


def init_params(key, input_size=128, hidden=64, num_classes=2):
    """Deterministic init mimicking nn.Linear default (uniform(+/-1/sqrt(fan_in)))."""
    k1, k2, k3, k4 = jax.random.split(key, 4)
    bound1 = 1.0 / jnp.sqrt(jnp.float32(input_size))
    bound2 = 1.0 / jnp.sqrt(jnp.float32(hidden))
    # Stored as [in, out] (transpose of PyTorch's [out, in]) so kernel does x @ W.
    w1 = jax.random.uniform(k1, (input_size, hidden), jnp.float32, -bound1, bound1)
    b1 = jax.random.uniform(k2, (hidden,), jnp.float32, -bound1, bound1)
    w2 = jax.random.uniform(k3, (hidden, num_classes), jnp.float32, -bound2, bound2)
    b2 = jax.random.uniform(k4, (num_classes,), jnp.float32, -bound2, bound2)
    return w1, b1, w2, b2


if __name__ == "__main__":
    key = jax.random.PRNGKey(0)
    k_x, k_p = jax.random.split(key)

    input_size, hidden, num_classes = 128, 64, 2
    w1, b1, w2, b2 = init_params(k_p, input_size, hidden, num_classes)

    def reference(xx):
        return jnp.maximum(xx @ w1 + b1, 0.0) @ w2 + b2

    params_f32 = prepare_params(w1, b1, w2, b2, compute_dtype=jnp.float32)
    params_bf16 = prepare_params(w1, b1, w2, b2)  # bf16 default

    # --- A: module's nominal tiny batch, forced Pallas path, f32 (exact).
    x_small = jax.random.normal(k_x, (8, input_size), jnp.float32)
    out_a = face_recognition_forward(x_small, params_f32, use_pallas="always")
    out_a = jax.block_until_ready(out_a)
    assert out_a.shape == (8, num_classes)
    assert jnp.allclose(out_a, reference(x_small), atol=1e-5, rtol=1e-5)

    # --- B: multi-step batch-tiled grid, bf16 MXU operands and bf16 input
    # (halved HBM read), f32 accumulation (loose tolerance).
    x_big = jax.random.normal(k_x, (384, input_size), jnp.float32)
    out_b = face_recognition_forward(x_big.astype(jnp.bfloat16), params_bf16,
                                     tile_b=128)
    out_b = jax.block_until_ready(out_b)
    assert out_b.shape == (384, num_classes)
    assert jnp.allclose(out_b, reference(x_big), atol=5e-2, rtol=5e-2)

    # --- C: batch not a multiple of the tile -> partial final block handled
    # by the cdiv grid (no host-side batch pad), f32 exact.
    x_ragged = jax.random.normal(k_x, (200, input_size), jnp.float32)
    out_c = face_recognition_forward(x_ragged, params_f32, tile_b=128)
    out_c = jax.block_until_ready(out_c)
    assert out_c.shape == (200, num_classes)
    assert jnp.allclose(out_c, reference(x_ragged), atol=1e-5, rtol=1e-5)

    # --- D: small-batch auto fallback (grid of 1 -> plain XLA), exact.
    out_d = face_recognition_forward(x_small, params_f32)
    out_d = jax.block_until_ready(out_d)
    assert jnp.allclose(out_d, reference(x_small), atol=1e-5, rtol=1e-5)

    print("KERNEL_OK")
</pallas_src>

<mosaic_0001>
module attributes {stable_mosaic.version = 11 : i64} {
  func.func @_mlp_kernel(%arg0: i32, %arg1: memref<8x128xf32, #tpu.memory_space<vmem>>, %arg2: memref<128x64xf32, #tpu.memory_space<vmem>>, %arg3: memref<1x64xf32, #tpu.memory_space<vmem>>, %arg4: memref<8x64xf32, #tpu.memory_space<vmem>>, %arg5: memref<8x1xf32, #tpu.memory_space<vmem>>, %arg6: memref<8x8xf32, #tpu.memory_space<vmem>>) attributes {dimension_semantics = [#tpu.dimension_semantics<parallel>], iteration_bounds = array<i64: 1>, scalar_prefetch = 0 : i64, scratch_operands = 0 : i64, tpu.core_type = #tpu.core_type<tc>, window_params = [{transform_indices = @transform_0, window_bounds = array<i64: 8, 128>}, {pipeline_mode = #tpu.pipeline_mode<synchronous>, transform_indices = @transform_1, window_bounds = array<i64: 128, 64>}, {pipeline_mode = #tpu.pipeline_mode<synchronous>, transform_indices = @transform_2, window_bounds = array<i64: 1, 64>}, {pipeline_mode = #tpu.pipeline_mode<synchronous>, transform_indices = @transform_3, window_bounds = array<i64: 8, 64>}, {pipeline_mode = #tpu.pipeline_mode<synchronous>, transform_indices = @transform_4, window_bounds = array<i64: 8, 1>}, {transform_indices = @transform_5, window_bounds = array<i64: 8, 8>}]} {
    %c0 = arith.constant 0 : index
    %c0_0 = arith.constant 0 : index
    %0 = vector.load %arg1[%c0, %c0_0] : memref<8x128xf32, #tpu.memory_space<vmem>>, vector<8x128xf32>
    %c0_1 = arith.constant 0 : index
    %c0_2 = arith.constant 0 : index
    %1 = vector.load %arg2[%c0_1, %c0_2] : memref<128x64xf32, #tpu.memory_space<vmem>>, vector<128x64xf32>
    %cst = arith.constant dense<0.000000e+00> : vector<8x64xf32>
    %2 = tpu.matmul %0, %1, %cst {dimension_numbers = #tpu.dot_dimension_numbers<[1], [0], [0], [1], [0, 0, 1, 1], [], []>} : vector<8x128xf32>, vector<128x64xf32>, vector<8x64xf32> -> vector<8x64xf32>
    %c0_3 = arith.constant 0 : index
    %c0_4 = arith.constant 0 : index
    %3 = vector.load %arg3[%c0_3, %c0_4] : memref<1x64xf32, #tpu.memory_space<vmem>>, vector<1x64xf32>
    %4 = vector.broadcast %3 : vector<1x64xf32> to vector<8x64xf32>
    %5 = arith.addf %2, %4 : vector<8x64xf32>
    %cst_5 = arith.constant 0.000000e+00 : f32
    %6 = vector.broadcast %cst_5 : f32 to vector<8x64xf32>
    %7 = arith.maximumf %5, %6 : vector<8x64xf32>
    %c0_6 = arith.constant 0 : index
    %c0_7 = arith.constant 0 : index
    %8 = vector.load %arg4[%c0_6, %c0_7] : memref<8x64xf32, #tpu.memory_space<vmem>>, vector<8x64xf32>
    %cst_8 = arith.constant dense<0.000000e+00> : vector<8x8xf32>
    %9 = tpu.matmul %8, %7, %cst_8 {dimension_numbers = #tpu.dot_dimension_numbers<[1], [1], [0], [0], [0, 0, 1, 0], [], []>} : vector<8x64xf32>, vector<8x64xf32>, vector<8x8xf32> -> vector<8x8xf32>
    %c0_9 = arith.constant 0 : index
    %c0_10 = arith.constant 0 : index
    %10 = vector.load %arg5[%c0_9, %c0_10] : memref<8x1xf32, #tpu.memory_space<vmem>>, vector<8x1xf32>
    %11 = vector.broadcast %10 : vector<8x1xf32> to vector<8x8xf32>
    %12 = arith.addf %9, %11 : vector<8x8xf32>
    %c0_11 = arith.constant 0 : index
    %c0_12 = arith.constant 0 : index
    %13 = vector.load %arg6[%c0_11, %c0_12] : memref<8x8xf32, #tpu.memory_space<vmem>>, vector<8x8xf32>
    tpu.vector_store %arg6[%c0_11, %c0_12], %12 {strides = array<i32>} : memref<8x8xf32, #tpu.memory_space<vmem>>, vector<8x8xf32>,
    return
  }
  func.func @transform_0(%arg0: i32) -> (i32, i32) {
    %c0_i32 = arith.constant 0 : i32
    %c0_i32_0 = arith.constant 0 : i32
    return %arg0, %c0_i32 : i32, i32
  }
  func.func @transform_1(%arg0: i32) -> (i32, i32) {
    %c0_i32 = arith.constant 0 : i32
    %c0_i32_0 = arith.constant 0 : i32
    %c0_i32_1 = arith.constant 0 : i32
    return %c0_i32, %c0_i32_0 : i32, i32
  }
  func.func @transform_2(%arg0: i32) -> (i32, i32) {
    %c0_i32 = arith.constant 0 : i32
    %c0_i32_0 = arith.constant 0 : i32
    %c0_i32_1 = arith.constant 0 : i32
    return %c0_i32, %c0_i32_0 : i32, i32
  }
  func.func @transform_3(%arg0: i32) -> (i32, i32) {
    %c0_i32 = arith.constant 0 : i32
    %c0_i32_0 = arith.constant 0 : i32
    %c0_i32_1 = arith.constant 0 : i32
    return %c0_i32, %c0_i32_0 : i32, i32
  }
  func.func @transform_4(%arg0: i32) -> (i32, i32) {
    %c0_i32 = arith.constant 0 : i32
    %c0_i32_0 = arith.constant 0 : i32
    %c0_i32_1 = arith.constant 0 : i32
    return %c0_i32, %c0_i32_0 : i32, i32
  }
  func.func @transform_5(%arg0: i32) -> (i32, i32) {
    %c0_i32 = arith.constant 0 : i32
    %c0_i32_0 = arith.constant 0 : i32
    return %c0_i32, %arg0 : i32, i32
  }
}

</mosaic_0001>

<llo_original>
// kernel: tpu_custom_call.1
$region0: #{tpu_custom_call.1}
  #allocation0 [shape = 'u32[]', space=smem, size = 0x4, offset = 0x4, fixed_abs, tag = 'smem constant byte address 0x4 - core index']
  #allocation1 [shape = 'u32[144,128]{1,0:T(1,128)}', space=vmem, size = 0x12000, scoped, tag = 'internal scratch']
  %s0 = inlined_call_operand.vmem [shape: f32[8,128], index: 0, kind: input, shape index: {}]
  %s1 = inlined_call_operand.vmem [shape: f32[128,64], index: 1, kind: input, shape index: {}]
  %s2 = inlined_call_operand.vmem [shape: f32[1,64], index: 2, kind: input, shape index: {}]
  %s3 = inlined_call_operand.vmem [shape: f32[8,64], index: 3, kind: input, shape index: {}]
  %s4 = inlined_call_operand.vmem [shape: f32[8,1], index: 4, kind: input, shape index: {}]
  %s5 = inlined_call_operand.hbm [shape: f32[8,8], index: 5, kind: output, shape index: {}]
  %s6 = sld [smem:[#allocation0]]
  $region30: #{tpu_custom_call.1} parent=0
    _
  %s8 = ssub.s32 1, %s6
  %s9 = scalar_select 0, %s8, %s6
  $region1: #{tpu_custom_call.1} parent=0
    #allocation2 [shape = 'u8[4096]{0}', space=vmem, size = 0x1000, scoped, tag = 'output window, operand 0, single buffered']
    #allocation3 [shape = 's32[1]{0}', space=sflag, size = 0x4, scoped, tag = 'scoped memory for tpu_custom_call.1']
    %10 = vsyncpa [#allocation3], 0
    // Predicated region
    $region2: #{tpu_custom_call.1} parent=1 // pred_check
      _
    $region3: #{tpu_custom_call.1} parent=1 // pred_check_branch
      %12 = sbr.rel (0) target = $region5
    $region4: #{tpu_custom_call.1} parent=1 // pred_region
      _
    $region5: #{tpu_custom_call.1} parent=1 // pred_fallthru
      _
    // Predicated region
    $region6: #{tpu_custom_call.1} parent=1 // pred_check
      _
    $region7: #{tpu_custom_call.1} parent=1 // pred_check_branch
      %14 = sbr.rel (0) target = $region9
    $region8: #{tpu_custom_call.1} parent=1 // pred_region
      _
    $region9: #{tpu_custom_call.1} parent=1 // pred_fallthru
      _
    // Predicated region
    $region10: #{tpu_custom_call.1} parent=1 // pred_check
      _
    $region11: #{tpu_custom_call.1} parent=1 // pred_check_branch
      %16 = sbr.rel (0) target = $region13
    $region12: #{tpu_custom_call.1} parent=1 // pred_region
      _
    $region13: #{tpu_custom_call.1} parent=1 // pred_fallthru
      _
    // Predicated region
    $region14: #{tpu_custom_call.1} parent=1 // pred_check
      _
    $region15: #{tpu_custom_call.1} parent=1 // pred_check_branch
      %18 = sbr.rel (0) target = $region17
    $region16: #{tpu_custom_call.1} parent=1 // pred_region
      _
    $region17: #{tpu_custom_call.1} parent=1 // pred_fallthru
      _
    // Predicated region
    $region18: #{tpu_custom_call.1} parent=1 // pred_check
      _
    $region19: #{tpu_custom_call.1} parent=1 // pred_check_branch
      %20 = sbr.rel (0) target = $region21
    $region20: #{tpu_custom_call.1} parent=1 // pred_region
      _
    $region21: #{tpu_custom_call.1} parent=1 // pred_fallthru
      _
    %v21 = vld [vmem:[%s0] sm:$0xff]
    %v22 = vld [vmem:[%s1] sm:$0xff]
    %v23 = vld [vmem:[%s1 + $0x8] sm:$0xff]
    %v24 = vld [vmem:[%s1 + $0x10] sm:$0xff]
    %v25 = vld [vmem:[%s1 + $0x18] sm:$0xff]
    %v26 = vld [vmem:[%s1 + $0x20] sm:$0xff]
    %v27 = vld [vmem:[%s1 + $0x28] sm:$0xff]
    %v28 = vld [vmem:[%s1 + $0x30] sm:$0xff]
    %v29 = vld [vmem:[%s1 + $0x38] sm:$0xff]
    %v30 = vld [vmem:[%s1 + $0x40] sm:$0xff]
    %v31 = vld [vmem:[%s1 + $0x48] sm:$0xff]
    %v32 = vld [vmem:[%s1 + $0x50] sm:$0xff]
    %v33 = vld [vmem:[%s1 + $0x58] sm:$0xff]
    %v34 = vld [vmem:[%s1 + $0x60] sm:$0xff]
    %v35 = vld [vmem:[%s1 + $0x68] sm:$0xff]
    %v36 = vld [vmem:[%s1 + $0x70] sm:$0xff]
    %v37 = vld [vmem:[%s1 + $0x78] sm:$0xff]
    %v38 = vld [vmem:[%s2] sm:$0x1]
    %v40 = vlaneseq
    %v41 = vshrl.u32 %v40, 7
    %v42 = vsub.s32 0, %v41
    %v43 = vrot.slane %v38, %v42
    %45 = vmatprep.subr.mxu0 0.0
    %46 = vmatpush1.msra.mxu0 %v22
    %47 = vmatprep.subr.mxu0 0.0
    %48 = vmatpush1.msra.mxu0 %v23
    %49 = vmatprep.subr.mxu0 0.0
    %50 = vmatpush1.msra.mxu0 %v24
    %51 = vmatprep.subr.mxu0 0.0
    %52 = vmatpush1.msra.mxu0 %v25
    %53 = vmatprep.subr.mxu0 0.0
    %54 = vmatpush1.msra.mxu0 %v26
    %55 = vmatprep.subr.mxu0 0.0
    %56 = vmatpush1.msra.mxu0 %v27
    %57 = vmatprep.subr.mxu0 0.0
    %58 = vmatpush1.msra.mxu0 %v28
    %59 = vmatprep.subr.mxu0 0.0
    %60 = vmatpush1.msra.mxu0 %v29
    %61 = vmatprep.subr.mxu0 0.0
    %62 = vmatpush1.msra.mxu0 %v30
    %63 = vmatprep.subr.mxu0 0.0
    %64 = vmatpush1.msra.mxu0 %v31
    %65 = vmatprep.subr.mxu0 0.0
    %66 = vmatpush1.msra.mxu0 %v32
    %67 = vmatprep.subr.mxu0 0.0
    %68 = vmatpush1.msra.mxu0 %v33
    %69 = vmatprep.subr.mxu0 0.0
    %70 = vmatpush1.msra.mxu0 %v34
    %71 = vmatprep.subr.mxu0 0.0
    %72 = vmatpush1.msra.mxu0 %v35
    %73 = vmatprep.subr.mxu0 0.0
    %74 = vmatpush1.msra.mxu0 %v36
    %75 = vmatprep.subr.mxu0 0.0
    %76 = vmatpush1.msra.mxu0 %v37
    %77 = vmatprep.subr.mxu0 0.0
    %78 = vmatpush1.msra.mxu0 0.0
    %79 = vmatprep.subr.mxu0 0.0
    %80 = vmatpush1.msra.mxu0 0.0
    %81 = vmatprep.subr.mxu0 0.0
    %82 = vmatpush1.msra.mxu0 0.0
    %83 = vmatprep.subr.mxu0 0.0
    %84 = vmatpush1.msra.mxu0 0.0
    %85 = vmatprep.subr.mxu0 0.0
    %86 = vmatpush1.msra.mxu0 0.0
    %87 = vmatprep.subr.mxu0 0.0
    %88 = vmatpush1.msra.mxu0 0.0
    %89 = vmatprep.subr.mxu0 0.0
    %90 = vmatpush1.msra.mxu0 0.0
    %91 = vmatprep.subr.mxu0 0.0
    %92 = vmatpush1.msra.mxu0 0.0
    %93 = vmatprep.subr.mxu0 0.0
    %94 = vmatpush1.msra.mxu0 0.0
    %95 = vmatprep.subr.mxu0 0.0
    %96 = vmatpush1.msra.mxu0 0.0
    %97 = vmatprep.subr.mxu0 0.0
    %98 = vmatpush1.msra.mxu0 0.0
    %99 = vmatprep.subr.mxu0 0.0
    %100 = vmatpush1.msra.mxu0 0.0
    %101 = vmatprep.subr.mxu0 0.0
    %102 = vmatpush1.msra.mxu0 0.0
    %103 = vmatprep.subr.mxu0 0.0
    %104 = vmatpush1.msra.mxu0 0.0
    %105 = vmatprep.subr.mxu0 0.0
    %106 = vmatpush1.msra.mxu0 0.0
    %107 = vmatprep.subr.mxu0 0.0
    %108 = vmatpush1.msra.mxu0 0.0
    %109 = vmatprep.mubr.f32.mxu0 0.0
    %110 = vmatmul.mubr.f32.gmra.mrb[0].mxu0 %v21
    %v111 = vpop.f32.mrb[0].mxu0
    %v112 = vadd.f32 %v43, %v111
    %v113 = vpop.f32.mrb[0].mxu0
    %114 = vdwg.mxu0
    %v115 = vmax.f32 %v112, 0.0
    %v116 = vld [vmem:[%s3] sm:$0xff]
    %v117 = vld [vmem:[%s4] sm:$0xff]
    %119 = vset.pattern.permute.xlu0 0
    %120 = vperm.xlu0 %119, %v117
    %v121 = vpop.permute.xlu0 %120
    %vm123 = vcmask 523264
    %v125 = vsel %vm123, %v116, 0
    %v128 = vsel %vm123, %v115, 0
    %130 = vmatprep.subr.mxu0 0.0
    %131 = vmatpush1.xpose.msra.mxu0 %v128
    %132 = vmatprep.subr.mxu0 0.0
    %133 = vmatpush1.xpose.msra.mxu0 0.0
    %134 = vmatprep.subr.mxu0 0.0
    %135 = vmatpush1.xpose.msra.mxu0 0.0
    %136 = vmatprep.subr.mxu0 0.0
    %137 = vmatpush1.xpose.msra.mxu0 0.0
    %138 = vmatprep.subr.mxu0 0.0
    %139 = vmatpush1.xpose.msra.mxu0 0.0
    %140 = vmatprep.subr.mxu0 0.0
    %141 = vmatpush1.xpose.msra.mxu0 0.0
    %142 = vmatprep.subr.mxu0 0.0
    %143 = vmatpush1.xpose.msra.mxu0 0.0
    %144 = vmatprep.subr.mxu0 0.0
    %145 = vmatpush1.xpose.msra.mxu0 0.0
    %146 = vmatprep.subr.mxu0 0.0
    %147 = vmatpush1.xpose.msra.mxu0 0.0
    %148 = vmatprep.subr.mxu0 0.0
    %149 = vmatpush1.xpose.msra.mxu0 0.0
    %150 = vmatprep.subr.mxu0 0.0
    %151 = vmatpush1.xpose.msra.mxu0 0.0
    %152 = vmatprep.subr.mxu0 0.0
    %153 = vmatpush1.xpose.msra.mxu0 0.0
    %154 = vmatprep.subr.mxu0 0.0
    %155 = vmatpush1.xpose.msra.mxu0 0.0
    %156 = vmatprep.subr.mxu0 0.0
    %157 = vmatpush1.xpose.msra.mxu0 0.0
    %158 = vmatprep.subr.mxu0 0.0
    %159 = vmatpush1.xpose.msra.mxu0 0.0
    %160 = vmatprep.subr.mxu0 0.0
    %161 = vmatpush1.xpose.msra.mxu0 0.0
    %162 = vmatprep.subr.mxu0 0.0
    %163 = vmatpush1.xpose.msra.mxu0 0.0
    %164 = vmatprep.subr.mxu0 0.0
    %165 = vmatpush1.xpose.msra.mxu0 0.0
    %166 = vmatprep.subr.mxu0 0.0
    %167 = vmatpush1.xpose.msra.mxu0 0.0
    %168 = vmatprep.subr.mxu0 0.0
    %169 = vmatpush1.xpose.msra.mxu0 0.0
    %170 = vmatprep.subr.mxu0 0.0
    %171 = vmatpush1.xpose.msra.mxu0 0.0
    %172 = vmatprep.subr.mxu0 0.0
    %173 = vmatpush1.xpose.msra.mxu0 0.0
    %174 = vmatprep.subr.mxu0 0.0
    %175 = vmatpush1.xpose.msra.mxu0 0.0
    %176 = vmatprep.subr.mxu0 0.0
    %177 = vmatpush1.xpose.msra.mxu0 0.0
    %178 = vmatprep.subr.mxu0 0.0
    %179 = vmatpush1.xpose.msra.mxu0 0.0
    %180 = vmatprep.subr.mxu0 0.0
    %181 = vmatpush1.xpose.msra.mxu0 0.0
    %182 = vmatprep.subr.mxu0 0.0
    %183 = vmatpush1.xpose.msra.mxu0 0.0
    %184 = vmatprep.subr.mxu0 0.0
    %185 = vmatpush1.xpose.msra.mxu0 0.0
    %186 = vmatprep.subr.mxu0 0.0
    %187 = vmatpush1.xpose.msra.mxu0 0.0
    %188 = vmatprep.subr.mxu0 0.0
    %189 = vmatpush1.xpose.msra.mxu0 0.0
    %190 = vmatprep.subr.mxu0 0.0
    %191 = vmatpush1.xpose.msra.mxu0 0.0
    %192 = vmatprep.subr.mxu0 0.0
    %193 = vmatpush1.xpose.msra.mxu0 0.0
    %194 = vmatprep.mubr.f32.mxu0 0.0
    %195 = vmatmul.mubr.f32.gmra.mrb[0].mxu0 %v125
    %v196 = vpop.f32.mrb[0].mxu0
    %v197 = vadd.f32 %v121, %v196
    %v198 = vpop.f32.mrb[0].mxu0
    %199 = vdwg.mxu0
    %vm200 = vcmask 64512
    %201 = vst.msk [vmem:[#allocation2] sm:$0xff] %vm200, %v197
    // Predicated region
    $region22: #{tpu_custom_call.1} parent=1 // pred_check
      _
    $region23: #{tpu_custom_call.1} parent=1 // pred_check_branch
      %203 = sbr.rel (0) target = $region25
    $region24: #{tpu_custom_call.1} parent=1 // pred_region
      %s205 = ssub.s32 128, 128
      %206 = vsyncadd [#allocation3], %s205
      %s208 = sshll.u32 [#allocation2], 4
      %s209 = int_to_ptr.vmem [resolvable:$true] %s208
      %211 = dma.vmem_to_hbm [thread:$0]  %s209, 128, %s5, [#allocation3]
    $region25: #{tpu_custom_call.1} parent=1 // pred_fallthru
      _
    // Predicated region
    $region26: #{tpu_custom_call.1} parent=1 // pred_check
      _
    $region27: #{tpu_custom_call.1} parent=1 // pred_check_branch
      %213 = sbr.rel (0) target = $region29
    $region28: #{tpu_custom_call.1} parent=1 // pred_region
      %214 = dma.done [#allocation3], 128
    $region29: #{tpu_custom_call.1} parent=1 // pred_fallthru
      _
    %215 = vsyncpa [#allocation3], 1

</llo_original>
